<compile_context>
chip_gen: v7x
topology: tpu7x:2x2x1
jax: 0.10.0
libtpu: 0.0.40
codegen_flags: <defaults>
</compile_context>

<pallas_src>
import jax
import jax.numpy as jnp
from jax.experimental import pallas as pl
from jax.experimental.pallas import tpu as pltpu

LANE = 128          # padded logit width for a full-vreg log_softmax
NEG_FILL = -1e30    # "-inf-safe" bias padding: exp() underflows to 0, max unaffected


def _round_up(n, m):
    return (n + m - 1) // m * m


def _choose_tb(B, tb_max, *, target_steps=8, min_tb=256):
    """Pick the batch tile.

    Large enough to amortize per-grid-step overhead and issue big contiguous x
    DMAs, small enough that the grid has >= target_steps steps so the
    "parallel" batch axis actually shards across v7x's two TensorCores.
    Always returns either B itself (single full-batch block) or a multiple of
    16 that is <= B (ragged last block handled by Pallas).
    """
    if B <= min_tb:
        return B
    tb = _round_up(pl.cdiv(B, target_steps), 16)
    tb = min(max(tb, min_tb), tb_max, (B // 16) * 16)
    return tb


# ----------------------------------------------------------------------------
# Kernel: fused 3-layer MLP + log_softmax on one (TB, 784) batch tile
# ----------------------------------------------------------------------------
def fcnet_kernel(x_ref,
                 w1_ref, b1_ref,
                 w2_ref, b2_ref,
                 w3_ref, b3_ref,
                 o_ref):
    # Layer 1: cast the x tile to bf16 *in VMEM* (zero extra HBM traffic),
    # bf16 x bf16 MXU matmul with f32 accumulation, bias + ReLU in f32 (VPU).
    x_bf16 = x_ref[...].astype(jnp.bfloat16)
    h = jnp.dot(x_bf16, w1_ref[...], preferred_element_type=jnp.float32)
    h = jnp.maximum(h + b1_ref[...], 0.0)

    # Layer 2: f32 matmul (tiny K; compute is irrelevant here) + ReLU
    h = jnp.dot(h, w2_ref[...], preferred_element_type=jnp.float32)
    h = jnp.maximum(h + b2_ref[...], 0.0)

    # Layer 3 (padded to 128 lanes): padded columns carry zero weight, -1e30 bias
    logits = jnp.dot(h, w3_ref[...], preferred_element_type=jnp.float32)
    logits = logits + b3_ref[...]

    # log_softmax along dim=1 (numerically stable).  Padded columns contribute
    # exp(-huge) == 0 to the normalizer, so the real classes are exact.
    m = jnp.max(logits, axis=1, keepdims=True)
    shifted = logits - m
    lse = jnp.log(jnp.sum(jnp.exp(shifted), axis=1, keepdims=True))
    log_probs = shifted - lse

    # Only the real classes are written back (o_ref is (TB, out_dim)); the
    # masked store is negligible since output is ~1% of per-row HBM bytes.
    o_ref[...] = log_probs[:, : o_ref.shape[-1]].astype(o_ref.dtype)


# ----------------------------------------------------------------------------
# Wrapper
# ----------------------------------------------------------------------------
def fcnet_forward(x, params, *, tb=2048):
    """x: any shape with total elements divisible by 784 (e.g. (B,1,28,28)).
    params: list of (W, b) with W shape (in, out), b shape (1, out)."""
    x2d = x.reshape(-1, 784).astype(jnp.float32)   # no-op if already f32
    B = x2d.shape[0]
    (w1, b1), (w2, b2), (w3, b3) = params
    h1, h2 = w1.shape[1], w2.shape[1]
    out_dim = w3.shape[1]

    TB = _choose_tb(B, tb)
    grid = (pl.cdiv(B, TB),)

    # Weights are tiny one-time casts/pads (<0.3 MiB total); x stays f32 in HBM.
    w1b = w1.astype(jnp.bfloat16)
    w3p = jnp.pad(w3.astype(jnp.float32), ((0, 0), (0, LANE - out_dim)))
    b3p = jnp.pad(b3.astype(jnp.float32), ((0, 0), (0, LANE - out_dim)),
                  constant_values=NEG_FILL)

    const = lambda i: (0, 0)            # weights/biases: VMEM-resident block
    batch = lambda i: (i, 0)            # x / out: tiled over the batch

    out = pl.pallas_call(
        fcnet_kernel,
        out_shape=jax.ShapeDtypeStruct((B, out_dim), jnp.float32),
        grid=grid,
        in_specs=[
            pl.BlockSpec((TB, 784), batch),     # x tile (f32, cast in-kernel)
            pl.BlockSpec((784, h1), const),     # W1 (bf16)
            pl.BlockSpec((1, h1), const),       # b1
            pl.BlockSpec((h1, h2), const),      # W2
            pl.BlockSpec((1, h2), const),       # b2
            pl.BlockSpec((h2, LANE), const),    # W3 (padded to 128 cols)
            pl.BlockSpec((1, LANE), const),     # b3 (padded to 128 cols)
        ],
        out_specs=pl.BlockSpec((TB, out_dim), batch),
        compiler_params=pltpu.CompilerParams(
            dimension_semantics=("parallel",),
            vmem_limit_bytes=48 * 1024 * 1024,
        ),
    )(x2d, w1b, b1.astype(jnp.float32),
      w2.astype(jnp.float32), b2.astype(jnp.float32), w3p, b3p)

    return out


def init_fcnet_params(layers, key):
    """Deterministic init mimicking nn.Linear default (uniform +/-1/sqrt(fan_in)).
    Weights stored as (in, out) = torch Linear weight transposed."""
    params = []
    for i in range(len(layers) - 1):
        fan_in, fan_out = layers[i], layers[i + 1]
        key, kw, kb = jax.random.split(key, 3)
        bound = 1.0 / jnp.sqrt(fan_in)
        w = jax.random.uniform(kw, (fan_in, fan_out), jnp.float32, -bound, bound)
        b = jax.random.uniform(kb, (1, fan_out), jnp.float32, -bound, bound)
        params.append((w, b))
    return params


# ----------------------------------------------------------------------------
# References for correctness checks
# ----------------------------------------------------------------------------
def fcnet_reference_matched(x, params):
    """Same numerics as the kernel (bf16 layer-1 inputs, f32 accum)."""
    (w1, b1), (w2, b2), (w3, b3) = params
    h = x.reshape(-1, 784).astype(jnp.bfloat16)
    h = jnp.dot(h, w1.astype(jnp.bfloat16), preferred_element_type=jnp.float32)
    h = jnp.maximum(h + b1, 0.0)
    h = jnp.maximum(h @ w2 + b2, 0.0)
    logits = h @ w3 + b3
    return jax.nn.log_softmax(logits, axis=1)


def fcnet_reference_f32(x, params):
    """Pure f32 reference matching the PyTorch module semantics."""
    h = x.reshape(-1, 784).astype(jnp.float32)
    n = len(params)
    for i, (w, b) in enumerate(params):
        h = h @ w + b
        if i < n - 1:
            h = jnp.maximum(h, 0.0)
    return jax.nn.log_softmax(h, axis=1)


if __name__ == "__main__":
    key = jax.random.PRNGKey(0)

    # FcNet(layers=[784, 64, 32, 10])  (3 Linear layers -> 2 ReLUs + log_softmax)
    layers = [784, 64, 32, 10]
    kx, kp, kx2 = jax.random.split(key, 3)
    params = init_fcnet_params(layers, kp)

    # --- small batch (single full-batch block) -------------------------------
    x = jax.random.normal(kx, (2, 1, 28, 28), jnp.float32)
    out = jax.block_until_ready(fcnet_forward(x, params))
    assert out.shape == (2, 10), out.shape

    ref_m = fcnet_reference_matched(x, params)
    assert jnp.allclose(out, ref_m, atol=1e-4, rtol=1e-4), \
        f"max abs diff (matched precision) {jnp.max(jnp.abs(out - ref_m))}"
    ref_f = fcnet_reference_f32(x, params)
    assert jnp.allclose(out, ref_f, atol=5e-2, rtol=5e-2), \
        f"max abs diff (f32 reference) {jnp.max(jnp.abs(out - ref_f))}"

    # --- larger batch exercising the multi-step grid + ragged last tile ------
    xb = jax.random.normal(kx2, (300, 1, 28, 28), jnp.float32)
    outb = jax.block_until_ready(fcnet_forward(xb, params))
    assert outb.shape == (300, 10), outb.shape
    refb = fcnet_reference_matched(xb, params)
    assert jnp.allclose(outb, refb, atol=1e-4, rtol=1e-4), \
        f"max abs diff (ragged tile, matched precision) {jnp.max(jnp.abs(outb - refb))}"

    print("KERNEL_OK")
</pallas_src>

<mosaic_0001>
module attributes {stable_mosaic.version = 11 : i64} {
  func.func @fcnet_kernel(%arg0: i32, %arg1: memref<2x784xf32, #tpu.memory_space<vmem>>, %arg2: memref<784x64xbf16, #tpu.memory_space<vmem>>, %arg3: memref<1x64xf32, #tpu.memory_space<vmem>>, %arg4: memref<64x32xf32, #tpu.memory_space<vmem>>, %arg5: memref<1x32xf32, #tpu.memory_space<vmem>>, %arg6: memref<32x128xf32, #tpu.memory_space<vmem>>, %arg7: memref<1x128xf32, #tpu.memory_space<vmem>>, %arg8: memref<2x10xf32, #tpu.memory_space<vmem>>) attributes {dimension_semantics = [#tpu.dimension_semantics<parallel>], iteration_bounds = array<i64: 1>, scalar_prefetch = 0 : i64, scratch_operands = 0 : i64, tpu.core_type = #tpu.core_type<tc>, window_params = [{transform_indices = @transform_0, window_bounds = array<i64: 2, 784>}, {pipeline_mode = #tpu.pipeline_mode<synchronous>, transform_indices = @transform_1, window_bounds = array<i64: 784, 64>}, {pipeline_mode = #tpu.pipeline_mode<synchronous>, transform_indices = @transform_2, window_bounds = array<i64: 1, 64>}, {pipeline_mode = #tpu.pipeline_mode<synchronous>, transform_indices = @transform_3, window_bounds = array<i64: 64, 32>}, {pipeline_mode = #tpu.pipeline_mode<synchronous>, transform_indices = @transform_4, window_bounds = array<i64: 1, 32>}, {pipeline_mode = #tpu.pipeline_mode<synchronous>, transform_indices = @transform_5, window_bounds = array<i64: 32, 128>}, {pipeline_mode = #tpu.pipeline_mode<synchronous>, transform_indices = @transform_6, window_bounds = array<i64: 1, 128>}, {transform_indices = @transform_7, window_bounds = array<i64: 2, 10>}]} {
    %c0 = arith.constant 0 : index
    %c0_0 = arith.constant 0 : index
    %0 = vector.load %arg1[%c0, %c0_0] : memref<2x784xf32, #tpu.memory_space<vmem>>, vector<2x784xf32>
    %1 = arith.truncf %0 : vector<2x784xf32> to vector<2x784xbf16>
    %c0_1 = arith.constant 0 : index
    %c0_2 = arith.constant 0 : index
    %2 = vector.load %arg2[%c0_1, %c0_2] : memref<784x64xbf16, #tpu.memory_space<vmem>>, vector<784x64xbf16>
    %cst = arith.constant dense<0.000000e+00> : vector<2x64xf32>
    %3 = tpu.matmul %1, %2, %cst {dimension_numbers = #tpu.dot_dimension_numbers<[1], [0], [0], [1], [0, 0, 1, 1], [], []>} : vector<2x784xbf16>, vector<784x64xbf16>, vector<2x64xf32> -> vector<2x64xf32>
    %c0_3 = arith.constant 0 : index
    %c0_4 = arith.constant 0 : index
    %4 = vector.load %arg3[%c0_3, %c0_4] : memref<1x64xf32, #tpu.memory_space<vmem>>, vector<1x64xf32>
    %5 = vector.broadcast %4 : vector<1x64xf32> to vector<2x64xf32>
    %6 = arith.addf %3, %5 : vector<2x64xf32>
    %cst_5 = arith.constant 0.000000e+00 : f32
    %7 = vector.broadcast %cst_5 : f32 to vector<2x64xf32>
    %8 = arith.maximumf %6, %7 : vector<2x64xf32>
    %c0_6 = arith.constant 0 : index
    %c0_7 = arith.constant 0 : index
    %9 = vector.load %arg4[%c0_6, %c0_7] : memref<64x32xf32, #tpu.memory_space<vmem>>, vector<64x32xf32>
    %cst_8 = arith.constant dense<0.000000e+00> : vector<2x32xf32>
    %10 = tpu.matmul %8, %9, %cst_8 {dimension_numbers = #tpu.dot_dimension_numbers<[1], [0], [0], [1], [0, 0, 1, 1], [], []>} : vector<2x64xf32>, vector<64x32xf32>, vector<2x32xf32> -> vector<2x32xf32>
    %c0_9 = arith.constant 0 : index
    %c0_10 = arith.constant 0 : index
    %11 = vector.load %arg5[%c0_9, %c0_10] : memref<1x32xf32, #tpu.memory_space<vmem>>, vector<1x32xf32>
    %12 = vector.broadcast %11 : vector<1x32xf32> to vector<2x32xf32>
    %13 = arith.addf %10, %12 : vector<2x32xf32>
    %cst_11 = arith.constant 0.000000e+00 : f32
    %14 = vector.broadcast %cst_11 : f32 to vector<2x32xf32>
    %15 = arith.maximumf %13, %14 : vector<2x32xf32>
    %c0_12 = arith.constant 0 : index
    %c0_13 = arith.constant 0 : index
    %16 = vector.load %arg6[%c0_12, %c0_13] : memref<32x128xf32, #tpu.memory_space<vmem>>, vector<32x128xf32>
    %cst_14 = arith.constant dense<0.000000e+00> : vector<2x128xf32>
    %17 = tpu.matmul %15, %16, %cst_14 {dimension_numbers = #tpu.dot_dimension_numbers<[1], [0], [0], [1], [0, 0, 1, 1], [], []>} : vector<2x32xf32>, vector<32x128xf32>, vector<2x128xf32> -> vector<2x128xf32>
    %c0_15 = arith.constant 0 : index
    %c0_16 = arith.constant 0 : index
    %18 = vector.load %arg7[%c0_15, %c0_16] : memref<1x128xf32, #tpu.memory_space<vmem>>, vector<1x128xf32>
    %19 = vector.broadcast %18 : vector<1x128xf32> to vector<2x128xf32>
    %20 = arith.addf %17, %19 : vector<2x128xf32>
    %cst_17 = arith.constant dense<0xFF800000> : vector<2xf32>
    %21 = vector.multi_reduction <maximumf>, %20, %cst_17 [1] : vector<2x128xf32> to vector<2xf32>
    %22 = vector.shape_cast %21 : vector<2xf32> to vector<2x1xf32>
    %23 = vector.broadcast %22 : vector<2x1xf32> to vector<2x128xf32>
    %24 = arith.subf %20, %23 : vector<2x128xf32>
    %25 = math.exp %24 : vector<2x128xf32>
    %cst_18 = arith.constant dense<0.000000e+00> : vector<2xf32>
    %26 = vector.multi_reduction <add>, %25, %cst_18 [1] : vector<2x128xf32> to vector<2xf32>
    %27 = vector.shape_cast %26 : vector<2xf32> to vector<2x1xf32>
    %28 = math.log %27 : vector<2x1xf32>
    %29 = vector.broadcast %28 : vector<2x1xf32> to vector<2x128xf32>
    %30 = arith.subf %24, %29 : vector<2x128xf32>
    %31 = vector.extract_strided_slice %30 {offsets = [0, 0], sizes = [2, 10], strides = [1, 1]} : vector<2x128xf32> to vector<2x10xf32>
    %c0_19 = arith.constant 0 : index
    %c0_20 = arith.constant 0 : index
    %32 = vector.load %arg8[%c0_19, %c0_20] : memref<2x10xf32, #tpu.memory_space<vmem>>, vector<2x10xf32>
    tpu.vector_store %arg8[%c0_19, %c0_20], %31 {strides = array<i32>} : memref<2x10xf32, #tpu.memory_space<vmem>>, vector<2x10xf32>,
    return
  }
  func.func @transform_0(%arg0: i32) -> (i32, i32) {
    %c0_i32 = arith.constant 0 : i32
    %c0_i32_0 = arith.constant 0 : i32
    return %arg0, %c0_i32 : i32, i32
  }
  func.func @transform_1(%arg0: i32) -> (i32, i32) {
    %c0_i32 = arith.constant 0 : i32
    %c0_i32_0 = arith.constant 0 : i32
    %c0_i32_1 = arith.constant 0 : i32
    return %c0_i32, %c0_i32_0 : i32, i32
  }
  func.func @transform_2(%arg0: i32) -> (i32, i32) {
    %c0_i32 = arith.constant 0 : i32
    %c0_i32_0 = arith.constant 0 : i32
    %c0_i32_1 = arith.constant 0 : i32
    return %c0_i32, %c0_i32_0 : i32, i32
  }
  func.func @transform_3(%arg0: i32) -> (i32, i32) {
    %c0_i32 = arith.constant 0 : i32
    %c0_i32_0 = arith.constant 0 : i32
    %c0_i32_1 = arith.constant 0 : i32
    return %c0_i32, %c0_i32_0 : i32, i32
  }
  func.func @transform_4(%arg0: i32) -> (i32, i32) {
    %c0_i32 = arith.constant 0 : i32
    %c0_i32_0 = arith.constant 0 : i32
    %c0_i32_1 = arith.constant 0 : i32
    return %c0_i32, %c0_i32_0 : i32, i32
  }
  func.func @transform_5(%arg0: i32) -> (i32, i32) {
    %c0_i32 = arith.constant 0 : i32
    %c0_i32_0 = arith.constant 0 : i32
    %c0_i32_1 = arith.constant 0 : i32
    return %c0_i32, %c0_i32_0 : i32, i32
  }
  func.func @transform_6(%arg0: i32) -> (i32, i32) {
    %c0_i32 = arith.constant 0 : i32
    %c0_i32_0 = arith.constant 0 : i32
    %c0_i32_1 = arith.constant 0 : i32
    return %c0_i32, %c0_i32_0 : i32, i32
  }
  func.func @transform_7(%arg0: i32) -> (i32, i32) {
    %c0_i32 = arith.constant 0 : i32
    %c0_i32_0 = arith.constant 0 : i32
    return %arg0, %c0_i32 : i32, i32
  }
}

</mosaic_0001>

<llo_original>
// kernel: tpu_custom_call.1
$region0: #{tpu_custom_call.1}
  #allocation0 [shape = 'u32[]', space=smem, size = 0x4, offset = 0x4, fixed_abs, tag = 'smem constant byte address 0x4 - core index']
  #allocation1 [shape = 'u32[144,128]{1,0:T(1,128)}', space=vmem, size = 0x12000, scoped, tag = 'internal scratch']
  %s0 = inlined_call_operand.vmem [shape: f32[2,784], index: 0, kind: input, shape index: {}]
  %s1 = inlined_call_operand.vmem [shape: bf16[784,64], index: 1, kind: input, shape index: {}]
  %s2 = inlined_call_operand.vmem [shape: f32[1,64], index: 2, kind: input, shape index: {}]
  %s3 = inlined_call_operand.vmem [shape: f32[64,32], index: 3, kind: input, shape index: {}]
  %s4 = inlined_call_operand.vmem [shape: f32[1,32], index: 4, kind: input, shape index: {}]
  %s5 = inlined_call_operand.vmem [shape: f32[32,128], index: 5, kind: input, shape index: {}]
  %s6 = inlined_call_operand.vmem [shape: f32[1,128], index: 6, kind: input, shape index: {}]
  %s7 = inlined_call_operand.hbm [shape: f32[2,10], index: 7, kind: output, shape index: {}]
  %s8 = sld [smem:[#allocation0]]
  $region38: #{tpu_custom_call.1} parent=0
    _
  %s10 = ssub.s32 1, %s8
  %s11 = scalar_select 0, %s10, %s8
  $region1: #{tpu_custom_call.1} parent=0
    #allocation2 [shape = 'u8[1024]{0}', space=vmem, size = 0x400, scoped, tag = 'output window, operand 0, single buffered']
    #allocation3 [shape = 's32[1]{0}', space=sflag, size = 0x4, scoped, tag = 'scoped memory for tpu_custom_call.1']
    %12 = vsyncpa [#allocation3], 0
    // Predicated region
    $region2: #{tpu_custom_call.1} parent=1 // pred_check
      _
    $region3: #{tpu_custom_call.1} parent=1 // pred_check_branch
      %14 = sbr.rel (0) target = $region5
    $region4: #{tpu_custom_call.1} parent=1 // pred_region
      _
    $region5: #{tpu_custom_call.1} parent=1 // pred_fallthru
      _
    // Predicated region
    $region6: #{tpu_custom_call.1} parent=1 // pred_check
      _
    $region7: #{tpu_custom_call.1} parent=1 // pred_check_branch
      %16 = sbr.rel (0) target = $region9
    $region8: #{tpu_custom_call.1} parent=1 // pred_region
      _
    $region9: #{tpu_custom_call.1} parent=1 // pred_fallthru
      _
    // Predicated region
    $region10: #{tpu_custom_call.1} parent=1 // pred_check
      _
    $region11: #{tpu_custom_call.1} parent=1 // pred_check_branch
      %18 = sbr.rel (0) target = $region13
    $region12: #{tpu_custom_call.1} parent=1 // pred_region
      _
    $region13: #{tpu_custom_call.1} parent=1 // pred_fallthru
      _
    // Predicated region
    $region14: #{tpu_custom_call.1} parent=1 // pred_check
      _
    $region15: #{tpu_custom_call.1} parent=1 // pred_check_branch
      %20 = sbr.rel (0) target = $region17
    $region16: #{tpu_custom_call.1} parent=1 // pred_region
      _
    $region17: #{tpu_custom_call.1} parent=1 // pred_fallthru
      _
    // Predicated region
    $region18: #{tpu_custom_call.1} parent=1 // pred_check
      _
    $region19: #{tpu_custom_call.1} parent=1 // pred_check_branch
      %22 = sbr.rel (0) target = $region21
    $region20: #{tpu_custom_call.1} parent=1 // pred_region
      _
    $region21: #{tpu_custom_call.1} parent=1 // pred_fallthru
      _
    // Predicated region
    $region22: #{tpu_custom_call.1} parent=1 // pred_check
      _
    $region23: #{tpu_custom_call.1} parent=1 // pred_check_branch
      %24 = sbr.rel (0) target = $region25
    $region24: #{tpu_custom_call.1} parent=1 // pred_region
      _
    $region25: #{tpu_custom_call.1} parent=1 // pred_fallthru
      _
    // Predicated region
    $region26: #{tpu_custom_call.1} parent=1 // pred_check
      _
    $region27: #{tpu_custom_call.1} parent=1 // pred_check_branch
      %26 = sbr.rel (0) target = $region29
    $region28: #{tpu_custom_call.1} parent=1 // pred_region
      _
    $region29: #{tpu_custom_call.1} parent=1 // pred_fallthru
      _
    %v28 = vld [vmem:[%s0] sm:$0xff]
    %v29 = vld [vmem:[%s0 + $0x8] sm:$0x3f]
    %v32 = vcombine.high %v28, %v28
    %v34 = vunpack.c.l.s4 1983009808
    %v35 = vunpack.c.0.s8 %v34
    %v36 = vlaneseq
    %v37 = vshrl.u32 %v36, 7
    %v38 = vsub.s32 %v35, %v37
    %v39 = vrot.slane %v28, %v38
    %v41 = vunpack.c.l.s4 1983009808
    %v42 = vunpack.c.0.s8 %v41
    %v43 = vlaneseq
    %v44 = vshrl.u32 %v43, 7
    %v45 = vsub.s32 %v42, %v44
    %v46 = vrot.slane %v32, %v45
    %v47 = vcombine.high %v39, %v39
    %v48 = vcombine.high %v46, %v46
    %v49 = vcombine.high %v29, %v29
    %v51 = vunpack.c.l.s4 1983009808
    %v52 = vunpack.c.0.s8 %v51
    %v53 = vlaneseq
    %v54 = vshrl.u32 %v53, 7
    %v55 = vsub.s32 %v52, %v54
    %v56 = vrot.slane %v29, %v55
    %v58 = vunpack.c.l.s4 1983009808
    %v59 = vunpack.c.0.s8 %v58
    %v60 = vlaneseq
    %v61 = vshrl.u32 %v60, 7
    %v62 = vsub.s32 %v59, %v61
    %v63 = vrot.slane %v49, %v62
    %v64 = vcombine.high %v56, %v56
    %v72 = vpack.c.bf16 %v39, %v39
    %v73 = vpack.c.bf16 %v47, %v47
    %v74 = vpack.c.bf16 %v46, %v46
    %v75 = vpack.c.bf16 %v48, %v48
    %v76 = vpack.c.bf16 %v56, %v56
    %v77 = vpack.c.bf16 %v64, %v64
    %v78 = vpack.c.bf16 %v63, %v63
    %v79 = vld [vmem:[%s1] sm:$0xf]
    %v80 = vld [vmem:[%s1 + $0x4] sm:$0xf]
    %v81 = vld [vmem:[%s1 + $0x8] sm:$0xf]
    %v82 = vld [vmem:[%s1 + $0xc] sm:$0xf]
    %v83 = vld [vmem:[%s1 + $0x10] sm:$0xf]
    %v84 = vld [vmem:[%s1 + $0x14] sm:$0xf]
    %v85 = vld [vmem:[%s1 + $0x18] sm:$0xf]
    %v86 = vld [vmem:[%s1 + $0x1c] sm:$0xf]
    %v87 = vld [vmem:[%s1 + $0x20] sm:$0xf]
    %v88 = vld [vmem:[%s1 + $0x24] sm:$0xf]
    %v89 = vld [vmem:[%s1 + $0x28] sm:$0xf]
    %v90 = vld [vmem:[%s1 + $0x2c] sm:$0xf]
    %v91 = vld [vmem:[%s1 + $0x30] sm:$0xf]
    %v92 = vld [vmem:[%s1 + $0x34] sm:$0xf]
    %v93 = vld [vmem:[%s1 + $0x38] sm:$0xf]
    %v94 = vld [vmem:[%s1 + $0x3c] sm:$0xf]
    %v95 = vld [vmem:[%s1 + $0x40] sm:$0xf]
    %v96 = vld [vmem:[%s1 + $0x44] sm:$0xf]
    %v97 = vld [vmem:[%s1 + $0x48] sm:$0xf]
    %v98 = vld [vmem:[%s1 + $0x4c] sm:$0xf]
    %v99 = vld [vmem:[%s1 + $0x50] sm:$0xf]
    %v100 = vld [vmem:[%s1 + $0x54] sm:$0xf]
    %v101 = vld [vmem:[%s1 + $0x58] sm:$0xf]
    %v102 = vld [vmem:[%s1 + $0x5c] sm:$0xf]
    %v103 = vld [vmem:[%s1 + $0x60] sm:$0xf]
    %v104 = vld [vmem:[%s1 + $0x64] sm:$0xf]
    %v105 = vld [vmem:[%s1 + $0x68] sm:$0xf]
    %v106 = vld [vmem:[%s1 + $0x6c] sm:$0xf]
    %v107 = vld [vmem:[%s1 + $0x70] sm:$0xf]
    %v108 = vld [vmem:[%s1 + $0x74] sm:$0xf]
    %v109 = vld [vmem:[%s1 + $0x78] sm:$0xf]
    %v110 = vld [vmem:[%s1 + $0x7c] sm:$0xf]
    %v111 = vld [vmem:[%s1 + $0x80] sm:$0xf]
    %v112 = vld [vmem:[%s1 + $0x84] sm:$0xf]
    %v113 = vld [vmem:[%s1 + $0x88] sm:$0xf]
    %v114 = vld [vmem:[%s1 + $0x8c] sm:$0xf]
    %v115 = vld [vmem:[%s1 + $0x90] sm:$0xf]
    %v116 = vld [vmem:[%s1 + $0x94] sm:$0xf]
    %v117 = vld [vmem:[%s1 + $0x98] sm:$0xf]
    %v118 = vld [vmem:[%s1 + $0x9c] sm:$0xf]
    %v119 = vld [vmem:[%s1 + $0xa0] sm:$0xf]
    %v120 = vld [vmem:[%s1 + $0xa4] sm:$0xf]
    %v121 = vld [vmem:[%s1 + $0xa8] sm:$0xf]
    %v122 = vld [vmem:[%s1 + $0xac] sm:$0xf]
    %v123 = vld [vmem:[%s1 + $0xb0] sm:$0xf]
    %v124 = vld [vmem:[%s1 + $0xb4] sm:$0xf]
    %v125 = vld [vmem:[%s1 + $0xb8] sm:$0xf]
    %v126 = vld [vmem:[%s1 + $0xbc] sm:$0xf]
    %v127 = vld [vmem:[%s1 + $0xc0] sm:$0xf]
    %v128 = vld [vmem:[%s1 + $0xc4] sm:$0xf]
    %v129 = vld [vmem:[%s1 + $0xc8] sm:$0xf]
    %v130 = vld [vmem:[%s1 + $0xcc] sm:$0xf]
    %v131 = vld [vmem:[%s1 + $0xd0] sm:$0xf]
    %v132 = vld [vmem:[%s1 + $0xd4] sm:$0xf]
    %v133 = vld [vmem:[%s1 + $0xd8] sm:$0xf]
    %v134 = vld [vmem:[%s1 + $0xdc] sm:$0xf]
    %v135 = vld [vmem:[%s1 + $0xe0] sm:$0xf]
    %v136 = vld [vmem:[%s1 + $0xe4] sm:$0xf]
    %v137 = vld [vmem:[%s1 + $0xe8] sm:$0xf]
    %v138 = vld [vmem:[%s1 + $0xec] sm:$0xf]
    %v139 = vld [vmem:[%s1 + $0xf0] sm:$0xf]
    %v140 = vld [vmem:[%s1 + $0xf4] sm:$0xf]
    %v141 = vld [vmem:[%s1 + $0xf8] sm:$0xf]
    %v142 = vld [vmem:[%s1 + $0xfc] sm:$0xf]
    %v143 = vld [vmem:[%s1 + $0x100] sm:$0xf]
    %v144 = vld [vmem:[%s1 + $0x104] sm:$0xf]
    %v145 = vld [vmem:[%s1 + $0x108] sm:$0xf]
    %v146 = vld [vmem:[%s1 + $0x10c] sm:$0xf]
    %v147 = vld [vmem:[%s1 + $0x110] sm:$0xf]
    %v148 = vld [vmem:[%s1 + $0x114] sm:$0xf]
    %v149 = vld [vmem:[%s1 + $0x118] sm:$0xf]
    %v150 = vld [vmem:[%s1 + $0x11c] sm:$0xf]
    %v151 = vld [vmem:[%s1 + $0x120] sm:$0xf]
    %v152 = vld [vmem:[%s1 + $0x124] sm:$0xf]
    %v153 = vld [vmem:[%s1 + $0x128] sm:$0xf]
    %v154 = vld [vmem:[%s1 + $0x12c] sm:$0xf]
    %v155 = vld [vmem:[%s1 + $0x130] sm:$0xf]
    %v156 = vld [vmem:[%s1 + $0x134] sm:$0xf]
    %v157 = vld [vmem:[%s1 + $0x138] sm:$0xf]
    %v158 = vld [vmem:[%s1 + $0x13c] sm:$0xf]
    %v159 = vld [vmem:[%s1 + $0x140] sm:$0xf]
    %v160 = vld [vmem:[%s1 + $0x144] sm:$0xf]
    %v161 = vld [vmem:[%s1 + $0x148] sm:$0xf]
    %v162 = vld [vmem:[%s1 + $0x14c] sm:$0xf]
    %v163 = vld [vmem:[%s1 + $0x150] sm:$0xf]
    %v164 = vld [vmem:[%s1 + $0x154] sm:$0xf]
    %v165 = vld [vmem:[%s1 + $0x158] sm:$0xf]
    %v166 = vld [vmem:[%s1 + $0x15c] sm:$0xf]
    %v167 = vld [vmem:[%s1 + $0x160] sm:$0xf]
    %v168 = vld [vmem:[%s1 + $0x164] sm:$0xf]
    %v169 = vld [vmem:[%s1 + $0x168] sm:$0xf]
    %v170 = vld [vmem:[%s1 + $0x16c] sm:$0xf]
    %v171 = vld [vmem:[%s1 + $0x170] sm:$0xf]
    %v172 = vld [vmem:[%s1 + $0x174] sm:$0xf]
    %v173 = vld [vmem:[%s1 + $0x178] sm:$0xf]
    %v174 = vld [vmem:[%s1 + $0x17c] sm:$0xf]
    %v175 = vld [vmem:[%s1 + $0x180] sm:$0xf]
    %v176 = vld [vmem:[%s1 + $0x184] sm:$0xf]
    %v177 = vld [vmem:[%s2] sm:$0x1]
    %v179 = vlaneseq
    %v180 = vshrl.u32 %v179, 7
    %v181 = vsub.s32 0, %v180
    %v182 = vrot.slane %v177, %v181
    %v282 = vunpack.c.l.b16 %v79
    %v283 = vunpack.c.l.b16 %v80
    %v284 = vunpack.c.l.b16 %v81
    %v285 = vunpack.c.l.b16 %v82
    %v286 = vunpack.c.l.b16 %v83
    %v287 = vunpack.c.l.b16 %v84
    %v288 = vunpack.c.l.b16 %v85
    %v289 = vunpack.c.l.b16 %v86
    %v290 = vunpack.c.l.b16 %v87
    %v291 = vunpack.c.l.b16 %v88
    %v292 = vunpack.c.l.b16 %v89
    %v293 = vunpack.c.l.b16 %v90
    %v294 = vunpack.c.l.b16 %v91
    %v295 = vunpack.c.l.b16 %v92
    %v296 = vunpack.c.l.b16 %v93
    %v297 = vunpack.c.l.b16 %v94
    %v298 = vunpack.c.l.b16 %v95
    %v299 = vunpack.c.l.b16 %v96
    %v300 = vunpack.c.l.b16 %v97
    %v301 = vunpack.c.l.b16 %v98
    %v302 = vunpack.c.l.b16 %v99
    %v303 = vunpack.c.l.b16 %v100
    %v304 = vunpack.c.l.b16 %v101
    %v305 = vunpack.c.l.b16 %v102
    %v306 = vunpack.c.l.b16 %v103
    %v307 = vunpack.c.l.b16 %v104
    %v308 = vunpack.c.l.b16 %v105
    %v309 = vunpack.c.l.b16 %v106
    %v310 = vunpack.c.l.b16 %v107
    %v311 = vunpack.c.l.b16 %v108
    %v312 = vunpack.c.l.b16 %v109
    %v313 = vunpack.c.l.b16 %v110
    %v314 = vunpack.c.l.b16 %v111
    %v315 = vunpack.c.l.b16 %v112
    %v316 = vunpack.c.l.b16 %v113
    %v317 = vunpack.c.l.b16 %v114
    %v318 = vunpack.c.l.b16 %v115
    %v319 = vunpack.c.l.b16 %v116
    %v320 = vunpack.c.l.b16 %v117
    %v321 = vunpack.c.l.b16 %v118
    %v322 = vunpack.c.l.b16 %v119
    %v323 = vunpack.c.l.b16 %v120
    %v324 = vunpack.c.l.b16 %v121
    %v325 = vunpack.c.l.b16 %v122
    %v326 = vunpack.c.l.b16 %v123
    %v327 = vunpack.c.l.b16 %v124
    %v328 = vunpack.c.l.b16 %v125
    %v329 = vunpack.c.l.b16 %v126
    %v330 = vunpack.c.l.b16 %v127
    %v331 = vunpack.c.l.b16 %v128
    %v332 = vunpack.c.l.b16 %v129
    %v333 = vunpack.c.l.b16 %v130
    %v334 = vunpack.c.l.b16 %v131
    %v335 = vunpack.c.l.b16 %v132
    %v336 = vunpack.c.l.b16 %v133
    %v337 = vunpack.c.l.b16 %v134
    %v338 = vunpack.c.l.b16 %v135
    %v339 = vunpack.c.l.b16 %v136
    %v340 = vunpack.c.l.b16 %v137
    %v341 = vunpack.c.l.b16 %v138
    %v342 = vunpack.c.l.b16 %v139
    %v343 = vunpack.c.l.b16 %v140
    %v344 = vunpack.c.l.b16 %v141
    %v345 = vunpack.c.l.b16 %v142
    %v346 = vunpack.c.l.b16 %v143
    %v347 = vunpack.c.l.b16 %v144
    %v348 = vunpack.c.l.b16 %v145
    %v349 = vunpack.c.l.b16 %v146
    %v350 = vunpack.c.l.b16 %v147
    %v351 = vunpack.c.l.b16 %v148
    %v352 = vunpack.c.l.b16 %v149
    %v353 = vunpack.c.l.b16 %v150
    %v354 = vunpack.c.l.b16 %v151
    %v355 = vunpack.c.l.b16 %v152
    %v356 = vunpack.c.l.b16 %v153
    %v357 = vunpack.c.l.b16 %v154
    %v358 = vunpack.c.l.b16 %v155
    %v359 = vunpack.c.l.b16 %v156
    %v360 = vunpack.c.l.b16 %v157
    %v361 = vunpack.c.l.b16 %v158
    %v362 = vunpack.c.l.b16 %v159
    %v363 = vunpack.c.l.b16 %v160
    %v364 = vunpack.c.l.b16 %v161
    %v365 = vunpack.c.l.b16 %v162
    %v366 = vunpack.c.l.b16 %v163
    %v367 = vunpack.c.l.b16 %v164
    %v368 = vunpack.c.l.b16 %v165
    %v369 = vunpack.c.l.b16 %v166
    %v370 = vunpack.c.l.b16 %v167
    %v371 = vunpack.c.l.b16 %v168
    %v372 = vunpack.c.l.b16 %v169
    %v373 = vunpack.c.l.b16 %v170
    %v374 = vunpack.c.l.b16 %v171
    %v375 = vunpack.c.l.b16 %v172
    %v376 = vunpack.c.l.b16 %v173
    %v377 = vunpack.c.l.b16 %v174
    %v378 = vunpack.c.l.b16 %v175
    %v379 = vunpack.c.l.b16 %v176
    %v380 = vpack.c.b16 %v283, %v282
    %v381 = vpack.c.b16 %v285, %v284
    %v382 = vpack.c.b16 %v287, %v286
    %v383 = vpack.c.b16 %v289, %v288
    %v384 = vpack.c.b16 %v291, %v290
    %v385 = vpack.c.b16 %v293, %v292
    %v386 = vpack.c.b16 %v295, %v294
    %v387 = vpack.c.b16 %v297, %v296
    %v388 = vpack.c.b16 %v299, %v298
    %v389 = vpack.c.b16 %v301, %v300
    %v390 = vpack.c.b16 %v303, %v302
    %v391 = vpack.c.b16 %v305, %v304
    %v392 = vpack.c.b16 %v307, %v306
    %v393 = vpack.c.b16 %v309, %v308
    %v394 = vpack.c.b16 %v311, %v310
    %v395 = vpack.c.b16 %v313, %v312
    %v396 = vpack.c.b16 %v315, %v314
    %v397 = vpack.c.b16 %v317, %v316
    %v398 = vpack.c.b16 %v319, %v318
    %v399 = vpack.c.b16 %v321, %v320
    %v400 = vpack.c.b16 %v323, %v322
    %v401 = vpack.c.b16 %v325, %v324
    %v402 = vpack.c.b16 %v327, %v326
    %v403 = vpack.c.b16 %v329, %v328
    %v404 = vpack.c.b16 %v331, %v330
    %v405 = vpack.c.b16 %v333, %v332
    %v406 = vpack.c.b16 %v335, %v334
    %v407 = vpack.c.b16 %v337, %v336
    %v408 = vpack.c.b16 %v339, %v338
    %v409 = vpack.c.b16 %v341, %v340
    %v410 = vpack.c.b16 %v343, %v342
    %v411 = vpack.c.b16 %v345, %v344
    %v412 = vpack.c.b16 %v347, %v346
    %v413 = vpack.c.b16 %v349, %v348
    %v414 = vpack.c.b16 %v351, %v350
    %v415 = vpack.c.b16 %v353, %v352
    %v416 = vpack.c.b16 %v355, %v354
    %v417 = vpack.c.b16 %v357, %v356
    %v418 = vpack.c.b16 %v359, %v358
    %v419 = vpack.c.b16 %v361, %v360
    %v420 = vpack.c.b16 %v363, %v362
    %v421 = vpack.c.b16 %v365, %v364
    %v422 = vpack.c.b16 %v367, %v366
    %v423 = vpack.c.b16 %v369, %v368
    %v424 = vpack.c.b16 %v371, %v370
    %v425 = vpack.c.b16 %v373, %v372
    %v426 = vpack.c.b16 %v375, %v374
    %v427 = vpack.c.b16 %v377, %v376
    %v428 = vpack.c.b16 %v379, %v378
    %vm478 = vcmask 130048
    %v480 = vsel %vm478, %v78, 0
    %482 = vmatprep.subr.bf16.mxu0 0
    %483 = vmatpush1.bf16.msra.mxu0 %v380
    %484 = vmatprep.subr.bf16.mxu0 0
    %485 = vmatpush1.bf16.msra.mxu0 %v381
    %486 = vmatprep.subr.bf16.mxu0 0
    %487 = vmatpush1.bf16.msra.mxu0 %v382
    %488 = vmatprep.subr.bf16.mxu0 0
    %489 = vmatpush1.bf16.msra.mxu0 %v383
    %490 = vmatprep.subr.bf16.mxu0 0
    %491 = vmatpush1.bf16.msra.mxu0 %v384
    %492 = vmatprep.subr.bf16.mxu0 0
    %493 = vmatpush1.bf16.msra.mxu0 %v385
    %494 = vmatprep.subr.bf16.mxu0 0
    %495 = vmatpush1.bf16.msra.mxu0 %v386
    %496 = vmatprep.subr.bf16.mxu0 0
    %497 = vmatpush1.bf16.msra.mxu0 %v387
    %498 = vmatprep.subr.bf16.mxu0 0
    %499 = vmatpush1.bf16.msra.mxu0 %v388
    %500 = vmatprep.subr.bf16.mxu0 0
    %501 = vmatpush1.bf16.msra.mxu0 %v389
    %502 = vmatprep.subr.bf16.mxu0 0
    %503 = vmatpush1.bf16.msra.mxu0 %v390
    %504 = vmatprep.subr.bf16.mxu0 0
    %505 = vmatpush1.bf16.msra.mxu0 %v391
    %506 = vmatprep.subr.bf16.mxu0 0
    %507 = vmatpush1.bf16.msra.mxu0 %v392
    %508 = vmatprep.subr.bf16.mxu0 0
    %509 = vmatpush1.bf16.msra.mxu0 %v393
    %510 = vmatprep.subr.bf16.mxu0 0
    %511 = vmatpush1.bf16.msra.mxu0 %v394
    %512 = vmatprep.subr.bf16.mxu0 0
    %513 = vmatpush1.bf16.msra.mxu0 %v395
    %514 = vmatprep.mubr.bf16.mxu0 %v73
    %515 = vmatmul.mubr.bf16.gmra.mrb[0].mxu0 %v72
    %v516 = vpop.f32.mrb[0].mxu0
    %v517 = vadd.f32 %v182, %v516
    %v518 = vpop.f32.mrb[0].mxu0
    %v519 = vpop.f32.mrb[0].mxu0
    %v520 = vpop.f32.mrb[0].mxu0
    %521 = vdwg.mxu0
    %522 = vmatprep.subr.bf16.mxu0 0
    %523 = vmatpush1.bf16.msra.mxu0 %v396
    %524 = vmatprep.subr.bf16.mxu0 0
    %525 = vmatpush1.bf16.msra.mxu0 %v397
    %526 = vmatprep.subr.bf16.mxu0 0
    %527 = vmatpush1.bf16.msra.mxu0 %v398
    %528 = vmatprep.subr.bf16.mxu0 0
    %529 = vmatpush1.bf16.msra.mxu0 %v399
    %530 = vmatprep.subr.bf16.mxu0 0
    %531 = vmatpush1.bf16.msra.mxu0 %v400
    %532 = vmatprep.subr.bf16.mxu0 0
    %533 = vmatpush1.bf16.msra.mxu0 %v401
    %534 = vmatprep.subr.bf16.mxu0 0
    %535 = vmatpush1.bf16.msra.mxu0 %v402
    %536 = vmatprep.subr.bf16.mxu0 0
    %537 = vmatpush1.bf16.msra.mxu0 %v403
    %538 = vmatprep.subr.bf16.mxu0 0
    %539 = vmatpush1.bf16.msra.mxu0 %v404
    %540 = vmatprep.subr.bf16.mxu0 0
    %541 = vmatpush1.bf16.msra.mxu0 %v405
    %542 = vmatprep.subr.bf16.mxu0 0
    %543 = vmatpush1.bf16.msra.mxu0 %v406
    %544 = vmatprep.subr.bf16.mxu0 0
    %545 = vmatpush1.bf16.msra.mxu0 %v407
    %546 = vmatprep.subr.bf16.mxu0 0
    %547 = vmatpush1.bf16.msra.mxu0 %v408
    %548 = vmatprep.subr.bf16.mxu0 0
    %549 = vmatpush1.bf16.msra.mxu0 %v409
    %550 = vmatprep.subr.bf16.mxu0 0
    %551 = vmatpush1.bf16.msra.mxu0 %v410
    %552 = vmatprep.subr.bf16.mxu0 0
    %553 = vmatpush1.bf16.msra.mxu0 %v411
    %554 = vmatprep.mubr.bf16.mxu0 %v75
    %555 = vmatmul.mubr.bf16.gmra.mrb[0].mxu0 %v74
    %v556 = vpop.f32.mrb[0].mxu0
    %v557 = vadd.f32 %v517, %v556
    %v558 = vpop.f32.mrb[0].mxu0
    %v559 = vpop.f32.mrb[0].mxu0
    %v560 = vpop.f32.mrb[0].mxu0
    %561 = vdwg.mxu0
    %562 = vmatprep.subr.bf16.mxu0 0
    %563 = vmatpush1.bf16.msra.mxu0 %v412
    %564 = vmatprep.subr.bf16.mxu0 0
    %565 = vmatpush1.bf16.msra.mxu0 %v413
    %566 = vmatprep.subr.bf16.mxu0 0
    %567 = vmatpush1.bf16.msra.mxu0 %v414
    %568 = vmatprep.subr.bf16.mxu0 0
    %569 = vmatpush1.bf16.msra.mxu0 %v415
    %570 = vmatprep.subr.bf16.mxu0 0
    %571 = vmatpush1.bf16.msra.mxu0 %v416
    %572 = vmatprep.subr.bf16.mxu0 0
    %573 = vmatpush1.bf16.msra.mxu0 %v417
    %574 = vmatprep.subr.bf16.mxu0 0
    %575 = vmatpush1.bf16.msra.mxu0 %v418
    %576 = vmatprep.subr.bf16.mxu0 0
    %577 = vmatpush1.bf16.msra.mxu0 %v419
    %578 = vmatprep.subr.bf16.mxu0 0
    %579 = vmatpush1.bf16.msra.mxu0 %v420
    %580 = vmatprep.subr.bf16.mxu0 0
    %581 = vmatpush1.bf16.msra.mxu0 %v421
    %582 = vmatprep.subr.bf16.mxu0 0
    %583 = vmatpush1.bf16.msra.mxu0 %v422
    %584 = vmatprep.subr.bf16.mxu0 0
    %585 = vmatpush1.bf16.msra.mxu0 %v423
    %586 = vmatprep.subr.bf16.mxu0 0
    %587 = vmatpush1.bf16.msra.mxu0 %v424
    %588 = vmatprep.subr.bf16.mxu0 0
    %589 = vmatpush1.bf16.msra.mxu0 %v425
    %590 = vmatprep.subr.bf16.mxu0 0
    %591 = vmatpush1.bf16.msra.mxu0 %v426
    %592 = vmatprep.subr.bf16.mxu0 0
    %593 = vmatpush1.bf16.msra.mxu0 %v427
    %594 = vmatprep.mubr.bf16.mxu0 %v77
    %595 = vmatmul.mubr.bf16.gmra.mrb[0].mxu0 %v76
    %v596 = vpop.f32.mrb[0].mxu0
    %v597 = vadd.f32 %v557, %v596
    %v598 = vpop.f32.mrb[0].mxu0
    %v599 = vpop.f32.mrb[0].mxu0
    %v600 = vpop.f32.mrb[0].mxu0
    %601 = vdwg.mxu0
    %602 = vmatprep.subr.bf16.mxu0 0
    %603 = vmatpush1.bf16.msra.mxu0 %v428
    %604 = vmatprep.subr.bf16.mxu0 0
    %605 = vmatpush1.bf16.msra.mxu0 0
    %606 = vmatprep.subr.bf16.mxu0 0
    %607 = vmatpush1.bf16.msra.mxu0 0
    %608 = vmatprep.subr.bf16.mxu0 0
    %609 = vmatpush1.bf16.msra.mxu0 0
    %610 = vmatprep.subr.bf16.mxu0 0
    %611 = vmatpush1.bf16.msra.mxu0 0
    %612 = vmatprep.subr.bf16.mxu0 0
    %613 = vmatpush1.bf16.msra.mxu0 0
    %614 = vmatprep.subr.bf16.mxu0 0
    %615 = vmatpush1.bf16.msra.mxu0 0
    %616 = vmatprep.subr.bf16.mxu0 0
    %617 = vmatpush1.bf16.msra.mxu0 0
    %618 = vmatprep.subr.bf16.mxu0 0
    %619 = vmatpush1.bf16.msra.mxu0 0
    %620 = vmatprep.subr.bf16.mxu0 0
    %621 = vmatpush1.bf16.msra.mxu0 0
    %622 = vmatprep.subr.bf16.mxu0 0
    %623 = vmatpush1.bf16.msra.mxu0 0
    %624 = vmatprep.subr.bf16.mxu0 0
    %625 = vmatpush1.bf16.msra.mxu0 0
    %626 = vmatprep.subr.bf16.mxu0 0
    %627 = vmatpush1.bf16.msra.mxu0 0
    %628 = vmatprep.subr.bf16.mxu0 0
    %629 = vmatpush1.bf16.msra.mxu0 0
    %630 = vmatprep.subr.bf16.mxu0 0
    %631 = vmatpush1.bf16.msra.mxu0 0
    %632 = vmatprep.subr.bf16.mxu0 0
    %633 = vmatpush1.bf16.msra.mxu0 0
    %634 = vmatprep.mubr.bf16.mxu0 0
    %635 = vmatmul.mubr.bf16.gmra.mrb[0].mxu0 %v480
    %v636 = vpop.f32.mrb[0].mxu0
    %v637 = vadd.f32 %v597, %v636
    %v638 = vpop.f32.mrb[0].mxu0
    %v639 = vpop.f32.mrb[0].mxu0
    %v640 = vpop.f32.mrb[0].mxu0
    %641 = vdwg.mxu0
    %v642 = vmax.f32 %v637, 0.0
    %v643 = vld [vmem:[%s3] sm:$0xff]
    %v644 = vld [vmem:[%s3 + $0x8] sm:$0xff]
    %v645 = vld [vmem:[%s3 + $0x10] sm:$0xff]
    %v646 = vld [vmem:[%s3 + $0x18] sm:$0xff]
    %v647 = vld [vmem:[%s3 + $0x20] sm:$0xff]
    %v648 = vld [vmem:[%s3 + $0x28] sm:$0xff]
    %v649 = vld [vmem:[%s3 + $0x30] sm:$0xff]
    %v650 = vld [vmem:[%s3 + $0x38] sm:$0xff]
    %v651 = vld [vmem:[%s4] sm:$0x1]
    %v653 = vlaneseq
    %v654 = vshrl.u32 %v653, 7
    %v655 = vsub.s32 0, %v654
    %v656 = vrot.slane %v651, %v655
    %vm658 = vcmask 523264
    %v660 = vsel %vm658, %v642, 0
    %662 = vmatprep.subr.mxu0 0.0
    %663 = vmatpush1.msra.mxu0 %v643
    %664 = vmatprep.subr.mxu0 0.0
    %665 = vmatpush1.msra.mxu0 %v644
    %666 = vmatprep.subr.mxu0 0.0
    %667 = vmatpush1.msra.mxu0 %v645
    %668 = vmatprep.subr.mxu0 0.0
    %669 = vmatpush1.msra.mxu0 %v646
    %670 = vmatprep.subr.mxu0 0.0
    %671 = vmatpush1.msra.mxu0 %v647
    %672 = vmatprep.subr.mxu0 0.0
    %673 = vmatpush1.msra.mxu0 %v648
    %674 = vmatprep.subr.mxu0 0.0
    %675 = vmatpush1.msra.mxu0 %v649
    %676 = vmatprep.subr.mxu0 0.0
    %677 = vmatpush1.msra.mxu0 %v650
    %678 = vmatprep.subr.mxu0 0.0
    %679 = vmatpush1.msra.mxu0 0.0
    %680 = vmatprep.subr.mxu0 0.0
    %681 = vmatpush1.msra.mxu0 0.0
    %682 = vmatprep.subr.mxu0 0.0
    %683 = vmatpush1.msra.mxu0 0.0
    %684 = vmatprep.subr.mxu0 0.0
    %685 = vmatpush1.msra.mxu0 0.0
    %686 = vmatprep.subr.mxu0 0.0
    %687 = vmatpush1.msra.mxu0 0.0
    %688 = vmatprep.subr.mxu0 0.0
    %689 = vmatpush1.msra.mxu0 0.0
    %690 = vmatprep.subr.mxu0 0.0
    %691 = vmatpush1.msra.mxu0 0.0
    %692 = vmatprep.subr.mxu0 0.0
    %693 = vmatpush1.msra.mxu0 0.0
    %694 = vmatprep.subr.mxu0 0.0
    %695 = vmatpush1.msra.mxu0 0.0
    %696 = vmatprep.subr.mxu0 0.0
    %697 = vmatpush1.msra.mxu0 0.0
    %698 = vmatprep.subr.mxu0 0.0
    %699 = vmatpush1.msra.mxu0 0.0
    %700 = vmatprep.subr.mxu0 0.0
    %701 = vmatpush1.msra.mxu0 0.0
    %702 = vmatprep.subr.mxu0 0.0
    %703 = vmatpush1.msra.mxu0 0.0
    %704 = vmatprep.subr.mxu0 0.0
    %705 = vmatpush1.msra.mxu0 0.0
    %706 = vmatprep.subr.mxu0 0.0
    %707 = vmatpush1.msra.mxu0 0.0
    %708 = vmatprep.subr.mxu0 0.0
    %709 = vmatpush1.msra.mxu0 0.0
    %710 = vmatprep.subr.mxu0 0.0
    %711 = vmatpush1.msra.mxu0 0.0
    %712 = vmatprep.subr.mxu0 0.0
    %713 = vmatpush1.msra.mxu0 0.0
    %714 = vmatprep.subr.mxu0 0.0
    %715 = vmatpush1.msra.mxu0 0.0
    %716 = vmatprep.subr.mxu0 0.0
    %717 = vmatpush1.msra.mxu0 0.0
    %718 = vmatprep.subr.mxu0 0.0
    %719 = vmatpush1.msra.mxu0 0.0
    %720 = vmatprep.subr.mxu0 0.0
    %721 = vmatpush1.msra.mxu0 0.0
    %722 = vmatprep.subr.mxu0 0.0
    %723 = vmatpush1.msra.mxu0 0.0
    %724 = vmatprep.subr.mxu0 0.0
    %725 = vmatpush1.msra.mxu0 0.0
    %726 = vmatprep.mubr.f32.mxu0 0.0
    %727 = vmatmul.mubr.f32.gmra.mrb[0].mxu0 %v660
    %v728 = vpop.f32.mrb[0].mxu0
    %v729 = vadd.f32 %v656, %v728
    %v730 = vpop.f32.mrb[0].mxu0
    %731 = vdwg.mxu0
    %v732 = vmax.f32 %v729, 0.0
    %v733 = vld [vmem:[%s5] sm:$0xff]
    %v734 = vld [vmem:[%s5 + $0x8] sm:$0xff]
    %v735 = vld [vmem:[%s5 + $0x10] sm:$0xff]
    %v736 = vld [vmem:[%s5 + $0x18] sm:$0xff]
    %v737 = vld [vmem:[%s6] sm:$0x1]
    %v739 = vlaneseq
    %v740 = vshrl.u32 %v739, 7
    %v741 = vsub.s32 0, %v740
    %v742 = vrot.slane %v737, %v741
    %vm744 = vcmask 261120
    %v746 = vsel %vm744, %v732, 0
    %748 = vmatprep.subr.mxu0 0.0
    %749 = vmatpush1.msra.mxu0 %v733
    %750 = vmatprep.subr.mxu0 0.0
    %751 = vmatpush1.msra.mxu0 %v734
    %752 = vmatprep.subr.mxu0 0.0
    %753 = vmatpush1.msra.mxu0 %v735
    %754 = vmatprep.subr.mxu0 0.0
    %755 = vmatpush1.msra.mxu0 %v736
    %756 = vmatprep.subr.mxu0 0.0
    %757 = vmatpush1.msra.mxu0 0.0
    %758 = vmatprep.subr.mxu0 0.0
    %759 = vmatpush1.msra.mxu0 0.0
    %760 = vmatprep.subr.mxu0 0.0
    %761 = vmatpush1.msra.mxu0 0.0
    %762 = vmatprep.subr.mxu0 0.0
    %763 = vmatpush1.msra.mxu0 0.0
    %764 = vmatprep.subr.mxu0 0.0
    %765 = vmatpush1.msra.mxu0 0.0
    %766 = vmatprep.subr.mxu0 0.0
    %767 = vmatpush1.msra.mxu0 0.0
    %768 = vmatprep.subr.mxu0 0.0
    %769 = vmatpush1.msra.mxu0 0.0
    %770 = vmatprep.subr.mxu0 0.0
    %771 = vmatpush1.msra.mxu0 0.0
    %772 = vmatprep.subr.mxu0 0.0
    %773 = vmatpush1.msra.mxu0 0.0
    %774 = vmatprep.subr.mxu0 0.0
    %775 = vmatpush1.msra.mxu0 0.0
    %776 = vmatprep.subr.mxu0 0.0
    %777 = vmatpush1.msra.mxu0 0.0
    %778 = vmatprep.subr.mxu0 0.0
    %779 = vmatpush1.msra.mxu0 0.0
    %780 = vmatprep.subr.mxu0 0.0
    %781 = vmatpush1.msra.mxu0 0.0
    %782 = vmatprep.subr.mxu0 0.0
    %783 = vmatpush1.msra.mxu0 0.0
    %784 = vmatprep.subr.mxu0 0.0
    %785 = vmatpush1.msra.mxu0 0.0
    %786 = vmatprep.subr.mxu0 0.0
    %787 = vmatpush1.msra.mxu0 0.0
    %788 = vmatprep.subr.mxu0 0.0
    %789 = vmatpush1.msra.mxu0 0.0
    %790 = vmatprep.subr.mxu0 0.0
    %791 = vmatpush1.msra.mxu0 0.0
    %792 = vmatprep.subr.mxu0 0.0
    %793 = vmatpush1.msra.mxu0 0.0
    %794 = vmatprep.subr.mxu0 0.0
    %795 = vmatpush1.msra.mxu0 0.0
    %796 = vmatprep.subr.mxu0 0.0
    %797 = vmatpush1.msra.mxu0 0.0
    %798 = vmatprep.subr.mxu0 0.0
    %799 = vmatpush1.msra.mxu0 0.0
    %800 = vmatprep.subr.mxu0 0.0
    %801 = vmatpush1.msra.mxu0 0.0
    %802 = vmatprep.subr.mxu0 0.0
    %803 = vmatpush1.msra.mxu0 0.0
    %804 = vmatprep.subr.mxu0 0.0
    %805 = vmatpush1.msra.mxu0 0.0
    %806 = vmatprep.subr.mxu0 0.0
    %807 = vmatpush1.msra.mxu0 0.0
    %808 = vmatprep.subr.mxu0 0.0
    %809 = vmatpush1.msra.mxu0 0.0
    %810 = vmatprep.subr.mxu0 0.0
    %811 = vmatpush1.msra.mxu0 0.0
    %812 = vmatprep.mubr.f32.mxu0 0.0
    %813 = vmatmul.mubr.f32.gmra.mrb[0].mxu0 %v746
    %v814 = vpop.f32.mrb[0].mxu0
    %v815 = vadd.f32 %v742, %v814
    %v816 = vpop.f32.mrb[0].mxu0
    %817 = vdwg.mxu0
    %vm818 = vcmask 1041408
    %v819 = vsel %vm818, %v815, -inf
    %820 = vmax.xlane.f32.xlu0 %v819
    %v821 = vpop.xlane.xlu0 %820
    %v822 = vsub.f32 %v815, %v821
    %v823 = vmul.f32 %v822, 1.442695
    %v824 = vpow.pop %v823
    %v825 = vsel %vm818, %v824, 0.0
    %826 = vadd.xlane.f32.xlu0 %v825
    %v827 = vpop.xlane.xlu0 %826
    %v828 = vlog2.pop %v827
    %v829 = vmul.f32 %v828, 0.6931472
    %v830 = vsub.f32 %v822, %v829
    %vm831 = vcmask 74752
    %832 = vst.msk [vmem:[#allocation2] sm:$0x3] %vm831, %v830
    // Predicated region
    $region30: #{tpu_custom_call.1} parent=1 // pred_check
      _
    $region31: #{tpu_custom_call.1} parent=1 // pred_check_branch
      %834 = sbr.rel (0) target = $region33
    $region32: #{tpu_custom_call.1} parent=1 // pred_region
      %s836 = ssub.s32 32, 32
      %837 = vsyncadd [#allocation3], %s836
      %s839 = sshll.u32 [#allocation2], 4
      %s840 = int_to_ptr.vmem [resolvable:$true] %s839
      %842 = dma.vmem_to_hbm [thread:$0]  %s840, 32, %s7, [#allocation3]
    $region33: #{tpu_custom_call.1} parent=1 // pred_fallthru
      _
    // Predicated region
    $region34: #{tpu_custom_call.1} parent=1 // pred_check
      _
    $region35: #{tpu_custom_call.1} parent=1 // pred_check_branch
      %844 = sbr.rel (0) target = $region37
    $region36: #{tpu_custom_call.1} parent=1 // pred_region
      %845 = dma.done [#allocation3], 32
    $region37: #{tpu_custom_call.1} parent=1 // pred_fallthru
      _
    %846 = vsyncpa [#allocation3], 1

</llo_original>
